<compile_context>
chip_gen: v5e
topology: v5e:2x2
jax: 0.10.0
libtpu: 0.0.40
codegen_flags: <defaults>
</compile_context>

<pallas_src>
import math
from functools import partial

import jax
import jax.numpy as jnp
from jax.experimental import pallas as pl
from jax.experimental.pallas import tpu as pltpu

EXPANSION = 1          # BasicBlock.expansion
_EPS = 1e-5
_VMEM_LIMIT = 32 * 1024 * 1024   # fits the scoped budget on v5e/v6e/v7x


def _round_up(x, m):
    return ((x + m - 1) // m) * m


def _cdiv(a, b):
    return -(-a // b)


# ----------------------------- matmul kernels -----------------------------

def _matmul_kernel_1k(a_ref, b_ref, o_ref):
    """Single K step: (tm, K) @ (K, tn), f32 MXU accumulation, bf16 store."""
    o_ref[...] = jnp.dot(a_ref[...], b_ref[...],
                         preferred_element_type=jnp.float32).astype(o_ref.dtype)


def _matmul_kernel_acc(a_ref, b_ref, o_ref, acc_ref):
    """K-tiled matmul: accumulate in a f32 VMEM scratch, emit bf16 on the last K step."""
    k = pl.program_id(2)

    @pl.when(k == 0)
    def _():
        acc_ref[...] = jnp.zeros_like(acc_ref)

    acc_ref[...] += jnp.dot(a_ref[...], b_ref[...],
                            preferred_element_type=jnp.float32)

    @pl.when(k == pl.num_programs(2) - 1)
    def _():
        o_ref[...] = acc_ref[...].astype(o_ref.dtype)


def pallas_matmul(a, b, out_dtype=jnp.bfloat16):
    """a: (M, K) bf16, b: (K, Np) bf16 with Np a multiple of 128 -> (M, Np) out_dtype.
    f32 accumulation on the MXU.  M/N ragged edges rely on Pallas block masking (garbage
    is masked on store); the K (reduction) axis is explicitly zero-padded when tiled."""
    if a.dtype != jnp.bfloat16:
        a = a.astype(jnp.bfloat16)
    if b.dtype != jnp.bfloat16:
        b = b.astype(jnp.bfloat16)
    M, K = a.shape
    Kb, Np = b.shape
    assert K == Kb and Np % 128 == 0

    # N tile: match the 256-wide MXU on v6e/v7x when possible, else lane-dense 128 (v5e native).
    tn = 256 if Np % 256 == 0 else 128
    nj = Np // tn

    # K tiling: one full-extent tile up to 2048, else a few 128-aligned steps.
    if K <= 2048:
        tk, nk = K, 1
    else:
        nk = _cdiv(K, 2048)
        tk = _round_up(_cdiv(K, nk), 128)
        Kp = nk * tk
        if Kp != K:                       # reduction axis must be explicitly zero-padded
            a = jnp.pad(a, ((0, 0), (0, Kp - K)))
            b = jnp.pad(b, ((0, Kp - K), (0, 0)))

    # M tile: big to amortize per-step overhead / weight re-fetch, but keep >= 2 parallel
    # grid steps so the second v7x TensorCore is never idle.
    tm = min(512, _round_up(M, 16))
    ni = _cdiv(M, tm)
    if ni * nj < 2 and M > 16:
        tm = _round_up(_cdiv(M, 2), 16)
        ni = _cdiv(M, tm)

    out_itemsize = 2 if out_dtype == jnp.bfloat16 else 4
    cost = pl.CostEstimate(flops=2 * M * Np * K, transcendentals=0,
                           bytes_accessed=2 * (M * K + K * Np) + M * Np * out_itemsize)

    if nk == 1:
        # Grid (j, i) with i innermost: the (K, tn) weight stripe's block index is
        # constant across consecutive steps -> Pallas skips the B re-DMA.
        return pl.pallas_call(
            _matmul_kernel_1k,
            out_shape=jax.ShapeDtypeStruct((M, Np), out_dtype),
            grid=(nj, ni),
            in_specs=[pl.BlockSpec((tm, tk), lambda j, i: (i, 0)),
                      pl.BlockSpec((tk, tn), lambda j, i: (0, j))],
            out_specs=pl.BlockSpec((tm, tn), lambda j, i: (i, j)),
            compiler_params=pltpu.CompilerParams(
                dimension_semantics=("parallel", "parallel"),
                vmem_limit_bytes=_VMEM_LIMIT),
            cost_estimate=cost,
        )(a, b)

    return pl.pallas_call(
        _matmul_kernel_acc,
        out_shape=jax.ShapeDtypeStruct((M, Np), out_dtype),
        grid=(nj, ni, nk),
        in_specs=[pl.BlockSpec((tm, tk), lambda j, i, k: (i, k)),
                  pl.BlockSpec((tk, tn), lambda j, i, k: (k, j))],
        out_specs=pl.BlockSpec((tm, tn), lambda j, i, k: (i, j)),
        scratch_shapes=[pltpu.VMEM((tm, tn), jnp.float32)],
        compiler_params=pltpu.CompilerParams(
            dimension_semantics=("parallel", "parallel", "arbitrary"),
            vmem_limit_bytes=_VMEM_LIMIT),
        cost_estimate=cost,
    )(a, b)


# ----------------------------- convolution (im2col + GEMM) -----------------------------

def _im2col(x, kh, kw, stride, padding):
    """NHWC (bf16) -> (N*OH*OW, kh*kw*C) bf16 patches (JAX layout glue).
    # TODO(synk): fold the kh*kw taps into the matmul K grid (direct conv with halo
    # loads) to remove this kh*kw-duplicated HBM copy entirely at large feature maps."""
    N, H, W, C = x.shape
    if padding:
        x = jnp.pad(x, ((0, 0), (padding, padding), (padding, padding), (0, 0)))
    OH = (H + 2 * padding - kh) // stride + 1
    OW = (W + 2 * padding - kw) // stride + 1
    cols = []
    for i in range(kh):
        for j in range(kw):
            cols.append(x[:, i:i + stride * OH:stride, j:j + stride * OW:stride, :])
    cols = jnp.concatenate(cols, axis=-1)                  # (N, OH, OW, kh*kw*C)
    return cols.reshape(N * OH * OW, kh * kw * C), (N, OH, OW)


def conv2d_gemm(x, w_mat, kh, kw, stride, padding):
    """x: NHWC bf16, w_mat: (kh*kw*cin, cout_p) bf16 (pre-prepped) -> NHWC bf16."""
    cols, (N, OH, OW) = _im2col(x, kh, kw, stride, padding)
    y = pallas_matmul(cols, w_mat)                         # (M, cout_p) bf16
    return y.reshape(N, OH, OW, w_mat.shape[1])


# ----------------------------- BatchNorm kernels (two-pass, row-tiled) -----------------------------

def _bn_stats_kernel(x_ref, sum_ref, ssq_ref, *, m_total, tr):
    """Pass 1: per-channel sum / sum-of-squares, accumulated (f32) over row tiles."""
    r = pl.program_id(1)

    @pl.when(r == 0)
    def _():
        sum_ref[...] = jnp.zeros_like(sum_ref)
        ssq_ref[...] = jnp.zeros_like(ssq_ref)

    x = x_ref[...].astype(jnp.float32)
    # Mask rows past the true extent (ragged last row tile reads unspecified data).
    row = jax.lax.broadcasted_iota(jnp.int32, x.shape, 0) + r * tr
    x = jnp.where(row < m_total, x, 0.0)
    sum_ref[...] += jnp.sum(x, axis=0, keepdims=True)
    ssq_ref[...] += jnp.sum(x * x, axis=0, keepdims=True)


def _bn_apply_kernel(x_ref, sum_ref, ssq_ref, g_ref, b_ref, o_ref, *, inv_m, relu):
    """Pass 2: normalize (+ReLU).  Stats -> scale/shift recomputed per block (tiny)."""
    mean = sum_ref[...] * inv_m
    var = jnp.maximum(ssq_ref[...] * inv_m - mean * mean, 0.0)   # clamp: no negative var
    scale = jax.lax.rsqrt(var + _EPS) * g_ref[...]
    shift = b_ref[...] - mean * scale
    y = x_ref[...].astype(jnp.float32) * scale + shift
    if relu:
        y = jnp.maximum(y, 0.0)
    o_ref[...] = y.astype(o_ref.dtype)


def _bn_apply_res_kernel(x_ref, sum_ref, ssq_ref, g_ref, b_ref, r_ref, o_ref, *, inv_m, relu):
    """Pass 2 with residual add (BasicBlock tail)."""
    mean = sum_ref[...] * inv_m
    var = jnp.maximum(ssq_ref[...] * inv_m - mean * mean, 0.0)
    scale = jax.lax.rsqrt(var + _EPS) * g_ref[...]
    shift = b_ref[...] - mean * scale
    y = x_ref[...].astype(jnp.float32) * scale + shift + r_ref[...].astype(jnp.float32)
    if relu:
        y = jnp.maximum(y, 0.0)
    o_ref[...] = y.astype(o_ref.dtype)


_BN_ROW_TILE = None


def _bn_row_tile():
    """Row tile: larger on the 128 MiB-VMEM parts (v5e/v6e), smaller on v7x (64 MiB)."""
    global _BN_ROW_TILE
    if _BN_ROW_TILE is None:
        try:
            vmem = pltpu.get_tpu_info().vmem_capacity_bytes
        except Exception:
            vmem = 64 * 1024 * 1024
        _BN_ROW_TILE = 2048 if vmem > 96 * 1024 * 1024 else 1024
    return _BN_ROW_TILE


def bn_act(x, bn, residual=None, relu=True, out_dtype=jnp.bfloat16):
    """Training-mode BatchNorm (batch stats) (+residual) (+ReLU) on NHWC activations.
    Two-pass, row-tiled; per-channel stats in f32, bf16 output.
    # TODO(synk): emit the per-channel sum/sumsq from the matmul epilogue so the stats
    # pass needs no extra HBM read of the activation."""
    N, H, W, C = x.shape
    M = N * H * W
    x2 = x.reshape(M, C)
    tc = 128 if C % 128 == 0 else C
    nc = C // tc
    tr = min(_bn_row_tile(), _round_up(M, 16))
    nr = _cdiv(M, tr)

    # Pass 1: per-channel sum / sum-of-squares.
    sums, ssqs = pl.pallas_call(
        partial(_bn_stats_kernel, m_total=M, tr=tr),
        out_shape=(jax.ShapeDtypeStruct((1, C), jnp.float32),
                   jax.ShapeDtypeStruct((1, C), jnp.float32)),
        grid=(nc, nr),
        in_specs=[pl.BlockSpec((tr, tc), lambda c, r: (r, c))],
        out_specs=(pl.BlockSpec((1, tc), lambda c, r: (0, c)),
                   pl.BlockSpec((1, tc), lambda c, r: (0, c))),
        compiler_params=pltpu.CompilerParams(
            dimension_semantics=("parallel", "arbitrary"),
            vmem_limit_bytes=_VMEM_LIMIT),
    )(x2)

    # Pass 2: normalize (+ residual) (+ ReLU).
    inv_m = 1.0 / M
    x_spec = pl.BlockSpec((tr, tc), lambda c, r: (r, c))
    p_spec = pl.BlockSpec((1, tc), lambda c, r: (0, c))
    cp = pltpu.CompilerParams(dimension_semantics=("parallel", "parallel"),
                              vmem_limit_bytes=_VMEM_LIMIT)
    out_shape = jax.ShapeDtypeStruct((M, C), out_dtype)
    if residual is None:
        y = pl.pallas_call(
            partial(_bn_apply_kernel, inv_m=inv_m, relu=relu),
            out_shape=out_shape, grid=(nc, nr),
            in_specs=[x_spec, p_spec, p_spec, p_spec, p_spec],
            out_specs=x_spec, compiler_params=cp,
        )(x2, sums, ssqs, bn['gamma'], bn['beta'])
    else:
        r2 = residual.reshape(M, C)
        y = pl.pallas_call(
            partial(_bn_apply_res_kernel, inv_m=inv_m, relu=relu),
            out_shape=out_shape, grid=(nc, nr),
            in_specs=[x_spec, p_spec, p_spec, p_spec, p_spec, x_spec],
            out_specs=x_spec, compiler_params=cp,
        )(x2, sums, ssqs, bn['gamma'], bn['beta'], r2)
    return y.reshape(N, H, W, C)


# ----------------------------- parameters -----------------------------

class KeyGen:
    def __init__(self, key):
        self._key = key

    def __call__(self):
        self._key, sub = jax.random.split(self._key)
        return sub


def conv_w(kg, kh, kw, cin, cout):
    scale = 1.0 / math.sqrt(kh * kw * cin)
    return jax.random.normal(kg(), (kh, kw, cin, cout), jnp.float32) * scale


def bn_p(c):
    return {'gamma': jnp.ones((1, c), jnp.float32),
            'beta': jnp.zeros((1, c), jnp.float32)}


def init_basic_block(kg, in_planes, planes, stride):
    """Raw (PyTorch-layout) parameters."""
    p = {
        'stride': stride,
        'conv1': conv_w(kg, 3, 3, in_planes, planes),
        'bn1': bn_p(planes),
        'conv2': conv_w(kg, 3, 3, planes, planes),
        'bn2': bn_p(planes),
    }
    if stride != 1 or in_planes != planes * EXPANSION:
        p['shortcut_conv'] = conv_w(kg, 1, 1, in_planes, planes * EXPANSION)
        p['shortcut_bn'] = bn_p(planes * EXPANSION)
    return p


def prepare_basic_block(p):
    """One-time weight prep (hoisted out of the hot path): reshape conv weights to
    (kh*kw*cin, cout_p) GEMM layout, pad output channels (and conv2 input channels) to a
    lane-dense multiple of 128, cast to bf16, pad BN params to match."""
    kh, kw, in_planes, planes = p['conv1'].shape
    planes_p = _round_up(planes * EXPANSION, 128)

    def prep_w(w, cin_pad=None):
        kh_, kw_, cin, cout = w.shape
        cin_p = cin if cin_pad is None else cin_pad
        w = jnp.pad(w, ((0, 0), (0, 0), (0, cin_p - cin), (0, planes_p - cout)))
        return w.reshape(kh_ * kw_ * cin_p, planes_p).astype(jnp.bfloat16)

    def prep_bn(bn):
        c = bn['gamma'].shape[-1]
        return {'gamma': jnp.pad(bn['gamma'], ((0, 0), (0, planes_p - c)),
                                 constant_values=1.0),
                'beta': jnp.pad(bn['beta'], ((0, 0), (0, planes_p - c)))}

    q = {'stride': p['stride'], 'planes': planes * EXPANSION, 'planes_p': planes_p,
         'conv1_mat': prep_w(p['conv1']),
         'conv2_mat': prep_w(p['conv2'], cin_pad=planes_p),   # consumes padded channels
         'bn1': prep_bn(p['bn1']),
         'bn2': prep_bn(p['bn2'])}
    if 'shortcut_conv' in p:
        q['shortcut_mat'] = prep_w(p['shortcut_conv'])
        q['shortcut_bn'] = prep_bn(p['shortcut_bn'])
    return q


# ----------------------------- forward pass -----------------------------

def basic_block_fwd(q, x):
    """BasicBlock.forward on NHWC bf16 activations.  Channels stay padded to a 128
    multiple between the two convs; caller slices to q['planes'] at the block output."""
    out = conv2d_gemm(x, q['conv1_mat'], 3, 3, q['stride'], 1)
    out = bn_act(out, q['bn1'], relu=True)                       # bn1 + ReLU (bf16)
    out = conv2d_gemm(out, q['conv2_mat'], 3, 3, 1, 1)
    if 'shortcut_mat' in q:                                      # downsample branch
        identity = conv2d_gemm(x, q['shortcut_mat'], q_kh := 1, 1, q['stride'], 0)
        identity = bn_act(identity, q['shortcut_bn'], relu=False)
    else:
        # identity shortcut: pad the input's channels once to the lane-dense width
        identity = jnp.pad(x, ((0, 0), (0, 0), (0, 0),
                               (0, q['planes_p'] - x.shape[-1])))
    return bn_act(out, q['bn2'], residual=identity, relu=True)   # bn2 + add + ReLU


def basic_block(q, x_nchw):
    """Public entry: NCHW f32 in / NCHW f32 out (PyTorch convention)."""
    x = jnp.transpose(x_nchw, (0, 2, 3, 1)).astype(jnp.bfloat16)
    y = basic_block_fwd(q, x)
    y = y[..., :q['planes']]                    # drop the lane padding once, at the edge
    return jnp.transpose(y, (0, 3, 1, 2)).astype(jnp.float32)


# ----------------------------- pure-JAX reference (self-check) -----------------------------

def _q(x):
    """Quantize to bf16 and back (mimics the kernel path's bf16 intermediates)."""
    return x.astype(jnp.bfloat16).astype(jnp.float32)


def _ref_conv(x, w, stride, padding):
    return jax.lax.conv_general_dilated(
        _q(x), _q(w), (stride, stride), [(padding, padding), (padding, padding)],
        dimension_numbers=('NHWC', 'HWIO', 'NHWC'),
        precision=jax.lax.Precision.HIGHEST)


def _ref_bn(x, bn):
    mean = jnp.mean(x, axis=(0, 1, 2), keepdims=True)
    var = jnp.maximum(jnp.mean(x * x, axis=(0, 1, 2), keepdims=True) - mean * mean, 0.0)
    g = bn['gamma'].reshape(1, 1, 1, -1)
    b = bn['beta'].reshape(1, 1, 1, -1)
    return (x - mean) * jax.lax.rsqrt(var + _EPS) * g + b


def ref_basic_block(p, x_nchw):
    x = _q(jnp.transpose(x_nchw, (0, 2, 3, 1)))
    out = _q(_ref_conv(x, p['conv1'], p['stride'], 1))           # conv1 out stored bf16
    out = _q(jax.nn.relu(_ref_bn(out, p['bn1'])))                # bn1 out stored bf16
    out = _q(_ref_conv(out, p['conv2'], 1, 1))                   # conv2 out stored bf16
    if 'shortcut_conv' in p:
        idn = _q(_ref_conv(x, p['shortcut_conv'], p['stride'], 0))
        idn = _q(_ref_bn(idn, p['shortcut_bn']))
    else:
        idn = x
    y = _q(jax.nn.relu(_ref_bn(out, p['bn2']) + idn))
    return jnp.transpose(y, (0, 3, 1, 2))


# ----------------------------- demo -----------------------------

if __name__ == "__main__":
    key = jax.random.PRNGKey(0)
    k_x, k_p = jax.random.split(key)

    # small shapes: batch=2, 16 input channels, 16x16 spatial
    N, C_in, H, W = 2, 16, 16, 16
    x_nchw = jax.random.normal(k_x, (N, C_in, H, W), jnp.float32)

    kg = KeyGen(k_p)
    p_identity = init_basic_block(kg, C_in, 16, stride=1)   # identity shortcut path
    p_down = init_basic_block(kg, C_in, 32, stride=2)       # 1x1-conv downsample path
    blk_identity = prepare_basic_block(p_identity)
    blk_down = prepare_basic_block(p_down)

    y1 = basic_block(blk_identity, x_nchw)
    y2 = basic_block(blk_down, x_nchw)
    jax.block_until_ready((y1, y2))

    assert y1.shape == (N, 16, H, W)
    assert y2.shape == (N, 32, H // 2, W // 2)
    assert bool(jnp.all(jnp.isfinite(y1))) and bool(jnp.all(jnp.isfinite(y2)))

    # correctness self-check against a pure-JAX reference with matched bf16 rounding points
    r1 = ref_basic_block(p_identity, x_nchw)
    r2 = ref_basic_block(p_down, x_nchw)
    assert bool(jnp.allclose(y1, r1, atol=5e-2, rtol=5e-2)), float(jnp.max(jnp.abs(y1 - r1)))
    assert bool(jnp.allclose(y2, r2, atol=5e-2, rtol=5e-2)), float(jnp.max(jnp.abs(y2 - r2)))

    print("KERNEL_OK")
</pallas_src>

<mosaic_0001>
module attributes {stable_mosaic.version = 11 : i64} {
  func.func @_matmul_kernel_1k(%arg0: i32, %arg1: i32, %arg2: memref<256x144xbf16, #tpu.memory_space<vmem>>, %arg3: memref<144x128xbf16, #tpu.memory_space<vmem>>, %arg4: memref<256x128xbf16, #tpu.memory_space<vmem>>) attributes {dimension_semantics = [#tpu.dimension_semantics<parallel>, #tpu.dimension_semantics<parallel>], iteration_bounds = array<i64: 1, 2>, scalar_prefetch = 0 : i64, scratch_operands = 0 : i64, tpu.core_type = #tpu.core_type<tc>, window_params = [{transform_indices = @transform_0, window_bounds = array<i64: 256, 144>}, {transform_indices = @transform_1, window_bounds = array<i64: 144, 128>}, {transform_indices = @transform_2, window_bounds = array<i64: 256, 128>}]} {
    %c0 = arith.constant 0 : index
    %c0_0 = arith.constant 0 : index
    %0 = vector.load %arg2[%c0, %c0_0] : memref<256x144xbf16, #tpu.memory_space<vmem>>, vector<256x144xbf16>
    %c0_1 = arith.constant 0 : index
    %c0_2 = arith.constant 0 : index
    %1 = vector.load %arg3[%c0_1, %c0_2] : memref<144x128xbf16, #tpu.memory_space<vmem>>, vector<144x128xbf16>
    %cst = arith.constant dense<0.000000e+00> : vector<256x128xf32>
    %2 = tpu.matmul %0, %1, %cst {dimension_numbers = #tpu.dot_dimension_numbers<[1], [0], [0], [1], [0, 0, 1, 1], [], []>} : vector<256x144xbf16>, vector<144x128xbf16>, vector<256x128xf32> -> vector<256x128xf32>
    %3 = arith.truncf %2 : vector<256x128xf32> to vector<256x128xbf16>
    %c0_3 = arith.constant 0 : index
    %c0_4 = arith.constant 0 : index
    %4 = vector.load %arg4[%c0_3, %c0_4] : memref<256x128xbf16, #tpu.memory_space<vmem>>, vector<256x128xbf16>
    tpu.vector_store %arg4[%c0_3, %c0_4], %3 {strides = array<i32>} : memref<256x128xbf16, #tpu.memory_space<vmem>>, vector<256x128xbf16>,
    return
  }
  func.func @transform_0(%arg0: i32, %arg1: i32) -> (i32, i32) {
    %c0_i32 = arith.constant 0 : i32
    %c0_i32_0 = arith.constant 0 : i32
    return %arg1, %c0_i32 : i32, i32
  }
  func.func @transform_1(%arg0: i32, %arg1: i32) -> (i32, i32) {
    %c0_i32 = arith.constant 0 : i32
    %c0_i32_0 = arith.constant 0 : i32
    return %c0_i32, %arg0 : i32, i32
  }
  func.func @transform_2(%arg0: i32, %arg1: i32) -> (i32, i32) {
    %c0_i32 = arith.constant 0 : i32
    return %arg1, %arg0 : i32, i32
  }
}

</mosaic_0001>

<llo_original>
// kernel: tpu_custom_call.1
$region0: #{tpu_custom_call.1}
  #allocation0 [shape = 'u32[]', space=smem, size = 0x4, offset = 0x4, fixed_abs, tag = 'smem constant byte address 0x4 - core index']
  #allocation1 [shape = 'u32[72,128]{1,0:T(1,128)}', space=vmem, size = 0x9000, scoped, tag = 'internal scratch']
  %s0 = inlined_call_operand.vmem [shape: bf16[512,144], index: 0, kind: input, shape index: {}]
  %s1 = inlined_call_operand.vmem [shape: bf16[144,128], index: 1, kind: input, shape index: {}]
  %s2 = inlined_call_operand.hbm [shape: bf16[512,128], index: 2, kind: output, shape index: {}]
  %s3 = sld [smem:[#allocation0]]
  $region41: #{tpu_custom_call.1} parent=0
    _
  %s5 = ssub.s32 1, %s3
  %s6 = scalar_select 0, %s5, %s3
  $region1: #{tpu_custom_call.1} parent=0
    #allocation2 [shape = 'u8[131072]{0}', space=vmem, size = 0x20000, scoped, tag = 'output window, operand 0']
    #allocation3 [shape = 's32[2]{0}', space=sflag, size = 0x8, scoped, tag = 'scoped memory for tpu_custom_call.1']
    %7 = vsyncpa [#allocation3], 0
    %s8 = scalar_lea.sflag [#allocation3], 1
    %9 = vsyncpa %s8, 0
    loop: start=0, step=1, limit=4
    $region2: #{tpu_custom_call.1} parent=1 // loop_pre_header
      _
    $region3: #{tpu_custom_call.1} parent=1 // loop_header
      %s11 = sphi 0, %s15
      %p12 = scmp.ge.s32.totalorder %s11, 4
      %s18 = sphi 0, %s30
      %s19 = sphi 0, %s26
      %s20 = sphi 0, %s18
      %s21 = sphi 0, %s19
      %s22 = sphi 0, %s20
      %s23 = sphi 0, %s21
      %s33 = sphi 0, %s35
      %s36 = sphi 0, %s33
      %s37 = sphi 0, %s36
      %s53 = sphi 0, %s37
      %s59 = sphi 0, %s61
      %s62 = sphi 0, %s59
      %s63 = sphi 0, %s62
      %s79 = sphi 0, %s63
      %s87 = sphi 0, %s89
      %s90 = sphi 0, %s87
      %s91 = sphi 0, %s90
      %s107 = sphi 0, %s91
    $region4: #{tpu_custom_call.1} parent=1 // loop_header_branch
      %14 = sbr.rel (%p12) target = $region8
    $region5: #{tpu_custom_call.1} parent=1 // loop_body
      %s16 = ssub.s32 %s11, 1
      %s17 = ssub.s32 %s11, 2
      %s24 = sadd.s32 1, %s19
      %p25 = scmp.ge.s32.totalorder %s24, 2
      %s26 = scalar_select %p25, 0, %s24
      %s27 = sadd.s32 1, %s18
      %s28 = scalar_select %p25, %s27, %s18
      %p29 = scmp.ge.s32.totalorder %s28, 1
      %s30 = scalar_select %p29, 0, %s28
      %s31 = ssub.s32 %s19, %s26
      %p32 = scmp.eq.s32.totalorder %s31, 0
      %s34 = sadd.s32 %s33, 1
      %s35 = scalar_select %p32, %s33, %s34
      %p38 = pneg %p32
      %p39 = scmp.eq.s32.totalorder %s11, 1
      %p40 = por %p38, %p39
      %p41 = scmp.ne.s32.totalorder %s33, %s36
      %p42 = scmp.eq.s32.totalorder %s11, 0
      %p43 = por %p41, %p42
      %p44 = scmp.ne.s32.totalorder %s33, %s36
      %p45 = scmp.eq.s32.totalorder %s16, 1
      %p46 = por %p44, %p45
      %p47 = scmp.ne.s32.totalorder %s36, %s37
      %p48 = scmp.eq.s32.totalorder %s16, 0
      %p49 = por %p47, %p48
      %p50 = scmp.ne.s32.totalorder %s36, %s37
      %p51 = scmp.eq.s32.totalorder %s17, 1
      %p52 = por %p50, %p51
      %p54 = scmp.ne.s32.totalorder %s37, %s53
      %p55 = scmp.eq.s32.totalorder %s17, 0
      %p56 = por %p54, %p55
      %s57 = ssub.s32 %s18, %s30
      %p58 = scmp.eq.s32.totalorder %s57, 0
      %s60 = sadd.s32 %s59, 1
      %s61 = scalar_select %p58, %s59, %s60
      %p64 = pneg %p58
      %p65 = scmp.eq.s32.totalorder %s11, 1
      %p66 = por %p64, %p65
      %p67 = scmp.ne.s32.totalorder %s59, %s62
      %p68 = scmp.eq.s32.totalorder %s11, 0
      %p69 = por %p67, %p68
      %p70 = scmp.ne.s32.totalorder %s59, %s62
      %p71 = scmp.eq.s32.totalorder %s16, 1
      %p72 = por %p70, %p71
      %p73 = scmp.ne.s32.totalorder %s62, %s63
      %p74 = scmp.eq.s32.totalorder %s16, 0
      %p75 = por %p73, %p74
      %p76 = scmp.ne.s32.totalorder %s62, %s63
      %p77 = scmp.eq.s32.totalorder %s17, 1
      %p78 = por %p76, %p77
      %p80 = scmp.ne.s32.totalorder %s63, %s79
      %p81 = scmp.eq.s32.totalorder %s17, 0
      %p82 = por %p80, %p81
      %s83 = ssub.s32 %s19, %s26
      %s84 = ssub.s32 %s18, %s30
      %s85 = sor.u32 %s83, %s84
      %p86 = scmp.eq.s32.totalorder %s85, 0
      %s88 = sadd.s32 %s87, 1
      %s89 = scalar_select %p86, %s87, %s88
      %p92 = pneg %p86
      %p93 = scmp.eq.s32.totalorder %s11, 1
      %p94 = por %p92, %p93
      %p95 = scmp.ne.s32.totalorder %s87, %s90
      %p96 = scmp.eq.s32.totalorder %s11, 0
      %p97 = por %p95, %p96
      %p98 = scmp.ne.s32.totalorder %s87, %s90
      %p99 = scmp.eq.s32.totalorder %s16, 1
      %p100 = por %p98, %p99
      %p101 = scmp.ne.s32.totalorder %s90, %s91
      %p102 = scmp.eq.s32.totalorder %s16, 0
      %p103 = por %p101, %p102
      %p104 = scmp.ne.s32.totalorder %s90, %s91
      %p105 = scmp.eq.s32.totalorder %s17, 1
      %p106 = por %p104, %p105
      %p108 = scmp.ne.s32.totalorder %s91, %s107
      %p109 = scmp.eq.s32.totalorder %s17, 0
      %p110 = por %p108, %p109
      %p111 = scmp.le.s32.totalorder 1, %s11
      %p112 = scmp.lt.s32.totalorder %s11, 3
      %p113 = pnand %p111, %p112
      %p114 = pneg %p113
      // Predicated region
      $region9: #{tpu_custom_call.1} parent=5 // pred_check
        _
      $region10: #{tpu_custom_call.1} parent=5 // pred_check_branch
        %116 = sbr.rel (%p113) target = $region12
      $region11: #{tpu_custom_call.1} parent=5 // pred_region
        %s117 = ssub.s32 %s11, 1
        // Predicated region
        $region13: #{tpu_custom_call.1} parent=11 // pred_check
          %p118 = pneg %p75
        $region14: #{tpu_custom_call.1} parent=11 // pred_check_branch
          %120 = sbr.rel (%p118) target = $region16
        $region15: #{tpu_custom_call.1} parent=11 // pred_region
          %p121 = scmp.lt.s32.totalorder %s20, 0
          %s122 = scalar_select %p121, %s20, 0
          %s123 = smul.addr %s122, 4
          %s124 = scalar_lea.vmem %s1, %s123
        $region16: #{tpu_custom_call.1} parent=11 // pred_fallthru
          _
      $region12: #{tpu_custom_call.1} parent=5 // pred_fallthru
        _
      %p125 = scmp.lt.s32.totalorder %s11, 2
      // Predicated region
      $region17: #{tpu_custom_call.1} parent=5 // pred_check
        %p126 = pneg %p125
      $region18: #{tpu_custom_call.1} parent=5 // pred_check_branch
        %128 = sbr.rel (%p126) target = $region20
      $region19: #{tpu_custom_call.1} parent=5 // pred_region
        // Predicated region
        $region21: #{tpu_custom_call.1} parent=19 // pred_check
          %p129 = pneg %p43
        $region22: #{tpu_custom_call.1} parent=19 // pred_check_branch
          %131 = sbr.rel (%p129) target = $region24
        $region23: #{tpu_custom_call.1} parent=19 // pred_region
          %s132 = smul.u32 32, %s19
          %p133 = scmp.lt.s32.totalorder %s132, 63
          %s134 = scalar_select %p133, %s132, 63
          %s135 = smul.addr %s134, 2
          %s136 = smul.addr %s135, 4
          %s137 = scalar_lea.vmem %s0, %s136
          %s138 = smul.u32 32, %s19
        $region24: #{tpu_custom_call.1} parent=19 // pred_fallthru
          _
      $region20: #{tpu_custom_call.1} parent=5 // pred_fallthru
        _
      %p139 = scmp.le.s32.totalorder 1, %s11
      %p140 = scmp.lt.s32.totalorder %s11, 3
      %p141 = pnand %p139, %p140
      %p142 = pneg %p141
      // Predicated region
      $region25: #{tpu_custom_call.1} parent=5 // pred_check
        _
      $region26: #{tpu_custom_call.1} parent=5 // pred_check_branch
        %144 = sbr.rel (%p141) target = $region28
      $region27: #{tpu_custom_call.1} parent=5 // pred_region
        %s145 = ssub.s32 %s11, 1
        %s146 = smul.u32 32, %s21
        %p147 = scmp.lt.s32.totalorder %s146, 63
        %s148 = scalar_select %p147, %s146, 63
        %s149 = smul.addr %s148, 2
        %s150 = smul.addr %s149, 4
        %s151 = scalar_lea.vmem %s0, %s150
        %p152 = pneg %p49
        %p153 = pneg %p46
        %p154 = scmp.lt.s32.totalorder %s20, 0
        %s155 = scalar_select %p154, %s20, 0
        %s156 = smul.addr %s155, 4
        %s157 = scalar_lea.vmem %s1, %s156
        %p158 = pneg %p75
        %p159 = pneg %p72
        %p160 = pneg %p103
        %p161 = pneg %p100
        %s162 = sand.u32 %s90, 1
        %s163 = scalar_lea.sflag [#allocation3], %s162
        %s164 = sand.u32 %s90, 1
        %s165 = smul.addr %s164, 128
        %s166 = scalar_lea.vmem [#allocation2], %s165
        %s167 = smul.u32 32, %s21
        %p168 = scmp.lt.s32.totalorder %s167, 63
        %s169 = scalar_select %p168, %s167, 63
        %s170 = smul.addr %s169, 2
        %s171 = smul.addr %s170, 4
        %s172 = scalar_lea.vmem %s0, %s171
        %s173 = smul.u32 32, %s21
        %p174 = scmp.lt.s32.totalorder %s20, 0
        %s175 = scalar_select %p174, %s20, 0
        %s176 = smul.addr %s175, 4
        %s177 = scalar_lea.vmem %s1, %s176
        %s178 = smul.u32 32, %s21
        %v180 = vld [vmem:[%s172] sm:$0xff]
        %v181 = vld [vmem:[%s172 + $0x8] sm:$0xff]
        %v182 = vld [vmem:[%s172 + $0x10] sm:$0xff]
        %v183 = vld [vmem:[%s172 + $0x18] sm:$0xff]
        %v184 = vld [vmem:[%s172 + $0x20] sm:$0xff]
        %v185 = vld [vmem:[%s172 + $0x28] sm:$0xff]
        %v186 = vld [vmem:[%s172 + $0x30] sm:$0xff]
        %v187 = vld [vmem:[%s172 + $0x38] sm:$0xff]
        %v188 = vld [vmem:[%s172 + $0x40] sm:$0xff]
        %v189 = vld [vmem:[%s172 + $0x48] sm:$0xff]
        %v190 = vld [vmem:[%s172 + $0x50] sm:$0xff]
        %v191 = vld [vmem:[%s172 + $0x58] sm:$0xff]
        %v192 = vld [vmem:[%s172 + $0x60] sm:$0xff]
        %v193 = vld [vmem:[%s172 + $0x68] sm:$0xff]
        %v194 = vld [vmem:[%s172 + $0x70] sm:$0xff]
        %v195 = vld [vmem:[%s172 + $0x78] sm:$0xff]
        %v196 = vld [vmem:[%s172 + $0x80] sm:$0xff]
        %v197 = vld [vmem:[%s172 + $0x88] sm:$0xff]
        %v198 = vld [vmem:[%s172 + $0x90] sm:$0xff]
        %v199 = vld [vmem:[%s172 + $0x98] sm:$0xff]
        %v200 = vld [vmem:[%s172 + $0xa0] sm:$0xff]
        %v201 = vld [vmem:[%s172 + $0xa8] sm:$0xff]
        %v202 = vld [vmem:[%s172 + $0xb0] sm:$0xff]
        %v203 = vld [vmem:[%s172 + $0xb8] sm:$0xff]
        %v204 = vld [vmem:[%s172 + $0xc0] sm:$0xff]
        %v205 = vld [vmem:[%s172 + $0xc8] sm:$0xff]
        %v206 = vld [vmem:[%s172 + $0xd0] sm:$0xff]
        %v207 = vld [vmem:[%s172 + $0xd8] sm:$0xff]
        %v208 = vld [vmem:[%s172 + $0xe0] sm:$0xff]
        %v209 = vld [vmem:[%s172 + $0xe8] sm:$0xff]
        %v210 = vld [vmem:[%s172 + $0xf0] sm:$0xff]
        %v211 = vld [vmem:[%s172 + $0xf8] sm:$0xff]
        %v212 = vld [vmem:[%s177] sm:$0xf]
        %v213 = vld [vmem:[%s177 + $0x4] sm:$0xf]
        %v214 = vld [vmem:[%s177 + $0x8] sm:$0xf]
        %v215 = vld [vmem:[%s177 + $0xc] sm:$0xf]
        %v216 = vld [vmem:[%s177 + $0x10] sm:$0xf]
        %v217 = vld [vmem:[%s177 + $0x14] sm:$0xf]
        %v218 = vld [vmem:[%s177 + $0x18] sm:$0xf]
        %v219 = vld [vmem:[%s177 + $0x1c] sm:$0xf]
        %v220 = vld [vmem:[%s177 + $0x20] sm:$0xf]
        %v221 = vld [vmem:[%s177 + $0x24] sm:$0xf]
        %v222 = vld [vmem:[%s177 + $0x28] sm:$0xf]
        %v223 = vld [vmem:[%s177 + $0x2c] sm:$0xf]
        %v224 = vld [vmem:[%s177 + $0x30] sm:$0xf]
        %v225 = vld [vmem:[%s177 + $0x34] sm:$0xf]
        %v226 = vld [vmem:[%s177 + $0x38] sm:$0xf]
        %v227 = vld [vmem:[%s177 + $0x3c] sm:$0xf]
        %v228 = vld [vmem:[%s177 + $0x40] sm:$0xf]
        %v229 = vld [vmem:[%s177 + $0x44] sm:$0xf]
        %v262 = vunpack.c.l.b16 %v180
        %v263 = vunpack.c.h.b16 %v180
        %v264 = vunpack.c.l.b16 %v181
        %v265 = vunpack.c.h.b16 %v181
        %v266 = vunpack.c.l.b16 %v182
        %v267 = vunpack.c.h.b16 %v182
        %v268 = vunpack.c.l.b16 %v183
        %v269 = vunpack.c.h.b16 %v183
        %v270 = vunpack.c.l.b16 %v184
        %v271 = vunpack.c.h.b16 %v184
        %v272 = vunpack.c.l.b16 %v185
        %v273 = vunpack.c.h.b16 %v185
        %v274 = vunpack.c.l.b16 %v186
        %v275 = vunpack.c.h.b16 %v186
        %v276 = vunpack.c.l.b16 %v187
        %v277 = vunpack.c.h.b16 %v187
        %v278 = vunpack.c.l.b16 %v188
        %v279 = vunpack.c.h.b16 %v188
        %v280 = vunpack.c.l.b16 %v189
        %v281 = vunpack.c.h.b16 %v189
        %v282 = vunpack.c.l.b16 %v190
        %v283 = vunpack.c.h.b16 %v190
        %v284 = vunpack.c.l.b16 %v191
        %v285 = vunpack.c.h.b16 %v191
        %v286 = vunpack.c.l.b16 %v192
        %v287 = vunpack.c.h.b16 %v192
        %v288 = vunpack.c.l.b16 %v193
        %v289 = vunpack.c.h.b16 %v193
        %v290 = vunpack.c.l.b16 %v194
        %v291 = vunpack.c.h.b16 %v194
        %v292 = vunpack.c.l.b16 %v195
        %v293 = vunpack.c.h.b16 %v195
        %v294 = vunpack.c.l.b16 %v196
        %v295 = vunpack.c.h.b16 %v196
        %v296 = vunpack.c.l.b16 %v197
        %v297 = vunpack.c.h.b16 %v197
        %v298 = vunpack.c.l.b16 %v198
        %v299 = vunpack.c.h.b16 %v198
        %v300 = vunpack.c.l.b16 %v199
        %v301 = vunpack.c.h.b16 %v199
        %v302 = vunpack.c.l.b16 %v200
        %v303 = vunpack.c.h.b16 %v200
        %v304 = vunpack.c.l.b16 %v201
        %v305 = vunpack.c.h.b16 %v201
        %v306 = vunpack.c.l.b16 %v202
        %v307 = vunpack.c.h.b16 %v202
        %v308 = vunpack.c.l.b16 %v203
        %v309 = vunpack.c.h.b16 %v203
        %v310 = vunpack.c.l.b16 %v204
        %v311 = vunpack.c.h.b16 %v204
        %v312 = vunpack.c.l.b16 %v205
        %v313 = vunpack.c.h.b16 %v205
        %v314 = vunpack.c.l.b16 %v206
        %v315 = vunpack.c.h.b16 %v206
        %v316 = vunpack.c.l.b16 %v207
        %v317 = vunpack.c.h.b16 %v207
        %v318 = vunpack.c.l.b16 %v208
        %v319 = vunpack.c.h.b16 %v208
        %v320 = vunpack.c.l.b16 %v209
        %v321 = vunpack.c.h.b16 %v209
        %v322 = vunpack.c.l.b16 %v210
        %v323 = vunpack.c.h.b16 %v210
        %v324 = vunpack.c.l.b16 %v211
        %v325 = vunpack.c.h.b16 %v211
        %v326 = vpack.c.b16 %v264, %v262
        %v327 = vpack.c.b16 %v265, %v263
        %v328 = vpack.c.b16 %v268, %v266
        %v329 = vpack.c.b16 %v269, %v267
        %v330 = vpack.c.b16 %v272, %v270
        %v331 = vpack.c.b16 %v273, %v271
        %v332 = vpack.c.b16 %v276, %v274
        %v333 = vpack.c.b16 %v277, %v275
        %v334 = vpack.c.b16 %v280, %v278
        %v335 = vpack.c.b16 %v281, %v279
        %v336 = vpack.c.b16 %v284, %v282
        %v337 = vpack.c.b16 %v285, %v283
        %v338 = vpack.c.b16 %v288, %v286
        %v339 = vpack.c.b16 %v289, %v287
        %v340 = vpack.c.b16 %v292, %v290
        %v341 = vpack.c.b16 %v293, %v291
        %v342 = vpack.c.b16 %v296, %v294
        %v343 = vpack.c.b16 %v297, %v295
        %v344 = vpack.c.b16 %v300, %v298
        %v345 = vpack.c.b16 %v301, %v299
        %v346 = vpack.c.b16 %v304, %v302
        %v347 = vpack.c.b16 %v305, %v303
        %v348 = vpack.c.b16 %v308, %v306
        %v349 = vpack.c.b16 %v309, %v307
        %v350 = vpack.c.b16 %v312, %v310
        %v351 = vpack.c.b16 %v313, %v311
        %v352 = vpack.c.b16 %v316, %v314
        %v353 = vpack.c.b16 %v317, %v315
        %v354 = vpack.c.b16 %v320, %v318
        %v355 = vpack.c.b16 %v321, %v319
        %v356 = vpack.c.b16 %v324, %v322
        %v357 = vpack.c.b16 %v325, %v323
        %v392 = vunpack.c.l.b16 %v212
        %v393 = vunpack.c.l.b16 %v213
        %v394 = vunpack.c.l.b16 %v214
        %v395 = vunpack.c.l.b16 %v215
        %v396 = vunpack.c.l.b16 %v216
        %v397 = vunpack.c.l.b16 %v217
        %v398 = vunpack.c.l.b16 %v218
        %v399 = vunpack.c.l.b16 %v219
        %v400 = vunpack.c.l.b16 %v220
        %v401 = vunpack.c.l.b16 %v221
        %v402 = vunpack.c.l.b16 %v222
        %v403 = vunpack.c.l.b16 %v223
        %v404 = vunpack.c.l.b16 %v224
        %v405 = vunpack.c.l.b16 %v225
        %v406 = vunpack.c.l.b16 %v226
        %v407 = vunpack.c.l.b16 %v227
        %v408 = vunpack.c.l.b16 %v228
        %v409 = vunpack.c.l.b16 %v229
        %v410 = vpack.c.b16 %v393, %v392
        %v411 = vpack.c.b16 %v395, %v394
        %v412 = vpack.c.b16 %v397, %v396
        %v413 = vpack.c.b16 %v399, %v398
        %v414 = vpack.c.b16 %v401, %v400
        %v415 = vpack.c.b16 %v403, %v402
        %v416 = vpack.c.b16 %v405, %v404
        %v417 = vpack.c.b16 %v407, %v406
        %v418 = vpack.c.b16 %v409, %v408
        %vm428 = vcmask 130048
        %v430 = vsel %vm428, %v327, 0
        %v433 = vsel %vm428, %v329, 0
        %v436 = vsel %vm428, %v331, 0
        %v439 = vsel %vm428, %v333, 0
        %v442 = vsel %vm428, %v335, 0
        %v445 = vsel %vm428, %v337, 0
        %v448 = vsel %vm428, %v339, 0
        %v451 = vsel %vm428, %v341, 0
        %v454 = vsel %vm428, %v343, 0
        %v457 = vsel %vm428, %v345, 0
        %v460 = vsel %vm428, %v347, 0
        %v463 = vsel %vm428, %v349, 0
        %v466 = vsel %vm428, %v351, 0
        %v469 = vsel %vm428, %v353, 0
        %v472 = vsel %vm428, %v355, 0
        %v475 = vsel %vm428, %v357, 0
        %477 = vmatpush.bf16.msra.mxu0 %v417
        %478 = vmatpush.bf16.msra.mxu0 %v416
        %479 = vmatpush.bf16.msra.mxu0 %v415
        %480 = vmatpush.bf16.msra.mxu0 %v414
        %481 = vmatpush.bf16.msra.mxu0 %v413
        %482 = vmatpush.bf16.msra.mxu0 %v412
        %483 = vmatpush.bf16.msra.mxu0 %v411
        %484 = vmatpush.bf16.msra.mxu0 %v410
        %485 = vmatmul.bf16.gmra.mxu0 %v326
        %v486 = vpop.f32.mrf.mxu0
        %v487 = vadd.f32 0.0, %v486
        %v488 = vpop.f32.mrf.mxu0
        %v489 = vadd.f32 0.0, %v488
        %490 = vmatmul.bf16.gmra.mxu0 %v328
        %v491 = vpop.f32.mrf.mxu0
        %v492 = vadd.f32 0.0, %v491
        %v493 = vpop.f32.mrf.mxu0
        %v494 = vadd.f32 0.0, %v493
        %495 = vmatmul.bf16.gmra.mxu0 %v330
        %v496 = vpop.f32.mrf.mxu0
        %v497 = vadd.f32 0.0, %v496
        %v498 = vpop.f32.mrf.mxu0
        %v499 = vadd.f32 0.0, %v498
        %500 = vmatmul.bf16.gmra.mxu0 %v332
        %v501 = vpop.f32.mrf.mxu0
        %v502 = vadd.f32 0.0, %v501
        %v503 = vpop.f32.mrf.mxu0
        %v504 = vadd.f32 0.0, %v503
        %505 = vmatmul.bf16.gmra.mxu0 %v334
        %v506 = vpop.f32.mrf.mxu0
        %v507 = vadd.f32 0.0, %v506
        %v508 = vpop.f32.mrf.mxu0
        %v509 = vadd.f32 0.0, %v508
        %510 = vmatmul.bf16.gmra.mxu0 %v336
        %v511 = vpop.f32.mrf.mxu0
        %v512 = vadd.f32 0.0, %v511
        %v513 = vpop.f32.mrf.mxu0
        %v514 = vadd.f32 0.0, %v513
        %515 = vmatmul.bf16.gmra.mxu0 %v338
        %v516 = vpop.f32.mrf.mxu0
        %v517 = vadd.f32 0.0, %v516
        %v518 = vpop.f32.mrf.mxu0
        %v519 = vadd.f32 0.0, %v518
        %520 = vmatmul.bf16.gmra.mxu0 %v340
        %v521 = vpop.f32.mrf.mxu0
        %v522 = vadd.f32 0.0, %v521
        %v523 = vpop.f32.mrf.mxu0
        %v524 = vadd.f32 0.0, %v523
        %525 = vmatmul.bf16.gmra.mxu0 %v342
        %v526 = vpop.f32.mrf.mxu0
        %v527 = vadd.f32 0.0, %v526
        %v528 = vpop.f32.mrf.mxu0
        %v529 = vadd.f32 0.0, %v528
        %530 = vmatmul.bf16.gmra.mxu0 %v344
        %v531 = vpop.f32.mrf.mxu0
        %v532 = vadd.f32 0.0, %v531
        %v533 = vpop.f32.mrf.mxu0
        %v534 = vadd.f32 0.0, %v533
        %535 = vmatmul.bf16.gmra.mxu0 %v346
        %v536 = vpop.f32.mrf.mxu0
        %v537 = vadd.f32 0.0, %v536
        %v538 = vpop.f32.mrf.mxu0
        %v539 = vadd.f32 0.0, %v538
        %540 = vmatmul.bf16.gmra.mxu0 %v348
        %v541 = vpop.f32.mrf.mxu0
        %v542 = vadd.f32 0.0, %v541
        %v543 = vpop.f32.mrf.mxu0
        %v544 = vadd.f32 0.0, %v543
        %545 = vmatmul.bf16.gmra.mxu0 %v350
        %v546 = vpop.f32.mrf.mxu0
        %v547 = vadd.f32 0.0, %v546
        %v548 = vpop.f32.mrf.mxu0
        %v549 = vadd.f32 0.0, %v548
        %550 = vmatmul.bf16.gmra.mxu0 %v352
        %v551 = vpop.f32.mrf.mxu0
        %v552 = vadd.f32 0.0, %v551
        %v553 = vpop.f32.mrf.mxu0
        %v554 = vadd.f32 0.0, %v553
        %555 = vmatmul.bf16.gmra.mxu0 %v354
        %v556 = vpop.f32.mrf.mxu0
        %v557 = vadd.f32 0.0, %v556
        %v558 = vpop.f32.mrf.mxu0
        %v559 = vadd.f32 0.0, %v558
        %560 = vmatmul.bf16.gmra.mxu0 %v356
        %v561 = vpop.f32.mrf.mxu0
        %v562 = vadd.f32 0.0, %v561
        %v563 = vpop.f32.mrf.mxu0
        %v564 = vadd.f32 0.0, %v563
        %565 = vdwg.mxu0
        %566 = vmatpush.bf16.msra.mxu0 0
        %567 = vmatpush.bf16.msra.mxu0 0
        %568 = vmatpush.bf16.msra.mxu0 0
        %569 = vmatpush.bf16.msra.mxu0 0
        %570 = vmatpush.bf16.msra.mxu0 0
        %571 = vmatpush.bf16.msra.mxu0 0
        %572 = vmatpush.bf16.msra.mxu0 0
        %573 = vmatpush.bf16.msra.mxu0 %v418
        %574 = vmatmul.bf16.gmra.mxu0 %v430
        %v575 = vpop.f32.mrf.mxu0
        %v576 = vadd.f32 %v487, %v575
        %v577 = vpop.f32.mrf.mxu0
        %v578 = vadd.f32 %v489, %v577
        %579 = vmatmul.bf16.gmra.mxu0 %v433
        %v580 = vpop.f32.mrf.mxu0
        %v581 = vadd.f32 %v492, %v580
        %v582 = vpop.f32.mrf.mxu0
        %v583 = vadd.f32 %v494, %v582
        %584 = vmatmul.bf16.gmra.mxu0 %v436
        %v585 = vpop.f32.mrf.mxu0
        %v586 = vadd.f32 %v497, %v585
        %v587 = vpop.f32.mrf.mxu0
        %v588 = vadd.f32 %v499, %v587
        %589 = vmatmul.bf16.gmra.mxu0 %v439
        %v590 = vpop.f32.mrf.mxu0
        %v591 = vadd.f32 %v502, %v590
        %v592 = vpop.f32.mrf.mxu0
        %v593 = vadd.f32 %v504, %v592
        %594 = vmatmul.bf16.gmra.mxu0 %v442
        %v595 = vpop.f32.mrf.mxu0
        %v596 = vadd.f32 %v507, %v595
        %v597 = vpop.f32.mrf.mxu0
        %v598 = vadd.f32 %v509, %v597
        %599 = vmatmul.bf16.gmra.mxu0 %v445
        %v600 = vpop.f32.mrf.mxu0
        %v601 = vadd.f32 %v512, %v600
        %v602 = vpop.f32.mrf.mxu0
        %v603 = vadd.f32 %v514, %v602
        %604 = vmatmul.bf16.gmra.mxu0 %v448
        %v605 = vpop.f32.mrf.mxu0
        %v606 = vadd.f32 %v517, %v605
        %v607 = vpop.f32.mrf.mxu0
        %v608 = vadd.f32 %v519, %v607
        %609 = vmatmul.bf16.gmra.mxu0 %v451
        %v610 = vpop.f32.mrf.mxu0
        %v611 = vadd.f32 %v522, %v610
        %v612 = vpop.f32.mrf.mxu0
        %v613 = vadd.f32 %v524, %v612
        %614 = vmatmul.bf16.gmra.mxu0 %v454
        %v615 = vpop.f32.mrf.mxu0
        %v616 = vadd.f32 %v527, %v615
        %v617 = vpop.f32.mrf.mxu0
        %v618 = vadd.f32 %v529, %v617
        %619 = vmatmul.bf16.gmra.mxu0 %v457
        %v620 = vpop.f32.mrf.mxu0
        %v621 = vadd.f32 %v532, %v620
        %v622 = vpop.f32.mrf.mxu0
        %v623 = vadd.f32 %v534, %v622
        %624 = vmatmul.bf16.gmra.mxu0 %v460
        %v625 = vpop.f32.mrf.mxu0
        %v626 = vadd.f32 %v537, %v625
        %v627 = vpop.f32.mrf.mxu0
        %v628 = vadd.f32 %v539, %v627
        %629 = vmatmul.bf16.gmra.mxu0 %v463
        %v630 = vpop.f32.mrf.mxu0
        %v631 = vadd.f32 %v542, %v630
        %v632 = vpop.f32.mrf.mxu0
        %v633 = vadd.f32 %v544, %v632
        %634 = vmatmul.bf16.gmra.mxu0 %v466
        %v635 = vpop.f32.mrf.mxu0
        %v636 = vadd.f32 %v547, %v635
        %v637 = vpop.f32.mrf.mxu0
        %v638 = vadd.f32 %v549, %v637
        %639 = vmatmul.bf16.gmra.mxu0 %v469
        %v640 = vpop.f32.mrf.mxu0
        %v641 = vadd.f32 %v552, %v640
        %v642 = vpop.f32.mrf.mxu0
        %v643 = vadd.f32 %v554, %v642
        %644 = vmatmul.bf16.gmra.mxu0 %v472
        %v645 = vpop.f32.mrf.mxu0
        %v646 = vadd.f32 %v557, %v645
        %v647 = vpop.f32.mrf.mxu0
        %v648 = vadd.f32 %v559, %v647
        %649 = vmatmul.bf16.gmra.mxu0 %v475
        %v650 = vpop.f32.mrf.mxu0
        %v651 = vadd.f32 %v562, %v650
        %v652 = vpop.f32.mrf.mxu0
        %v653 = vadd.f32 %v564, %v652
        %654 = vdwg.mxu0
        %v655 = vpack.c.bf16 %v576, %v576
        %v656 = vpack.c.bf16 %v578, %v578
        %v657 = vpack.c.bf16 %v581, %v581
        %v658 = vpack.c.bf16 %v583, %v583
        %v659 = vpack.c.bf16 %v586, %v586
        %v660 = vpack.c.bf16 %v588, %v588
        %v661 = vpack.c.bf16 %v591, %v591
        %v662 = vpack.c.bf16 %v593, %v593
        %v663 = vpack.c.bf16 %v596, %v596
        %v664 = vpack.c.bf16 %v598, %v598
        %v665 = vpack.c.bf16 %v601, %v601
        %v666 = vpack.c.bf16 %v603, %v603
        %v667 = vpack.c.bf16 %v606, %v606
        %v668 = vpack.c.bf16 %v608, %v608
        %v669 = vpack.c.bf16 %v611, %v611
        %v670 = vpack.c.bf16 %v613, %v613
        %v671 = vpack.c.bf16 %v616, %v616
        %v672 = vpack.c.bf16 %v618, %v618
        %v673 = vpack.c.bf16 %v621, %v621
        %v674 = vpack.c.bf16 %v623, %v623
        %v675 = vpack.c.bf16 %v626, %v626
        %v676 = vpack.c.bf16 %v628, %v628
        %v677 = vpack.c.bf16 %v631, %v631
        %v678 = vpack.c.bf16 %v633, %v633
        %v679 = vpack.c.bf16 %v636, %v636
        %v680 = vpack.c.bf16 %v638, %v638
        %v681 = vpack.c.bf16 %v641, %v641
        %v682 = vpack.c.bf16 %v643, %v643
        %v683 = vpack.c.bf16 %v646, %v646
        %v684 = vpack.c.bf16 %v648, %v648
        %v685 = vpack.c.bf16 %v651, %v651
        %v686 = vpack.c.bf16 %v653, %v653
        %687 = vst [vmem:[%s166] sm:$0xf] %v655
        %688 = vst [vmem:[%s166 + $0x4] sm:$0xf] %v656
        %689 = vst [vmem:[%s166 + $0x8] sm:$0xf] %v657
        %690 = vst [vmem:[%s166 + $0xc] sm:$0xf] %v658
        %691 = vst [vmem:[%s166 + $0x10] sm:$0xf] %v659
        %692 = vst [vmem:[%s166 + $0x14] sm:$0xf] %v660
        %693 = vst [vmem:[%s166 + $0x18] sm:$0xf] %v661
        %694 = vst [vmem:[%s166 + $0x1c] sm:$0xf] %v662
        %695 = vst [vmem:[%s166 + $0x20] sm:$0xf] %v663
        %696 = vst [vmem:[%s166 + $0x24] sm:$0xf] %v664
        %697 = vst [vmem:[%s166 + $0x28] sm:$0xf] %v665
        %698 = vst [vmem:[%s166 + $0x2c] sm:$0xf] %v666
        %699 = vst [vmem:[%s166 + $0x30] sm:$0xf] %v667
        %700 = vst [vmem:[%s166 + $0x34] sm:$0xf] %v668
        %701 = vst [vmem:[%s166 + $0x38] sm:$0xf] %v669
        %702 = vst [vmem:[%s166 + $0x3c] sm:$0xf] %v670
        %703 = vst [vmem:[%s166 + $0x40] sm:$0xf] %v671
        %704 = vst [vmem:[%s166 + $0x44] sm:$0xf] %v672
        %705 = vst [vmem:[%s166 + $0x48] sm:$0xf] %v673
        %706 = vst [vmem:[%s166 + $0x4c] sm:$0xf] %v674
        %707 = vst [vmem:[%s166 + $0x50] sm:$0xf] %v675
        %708 = vst [vmem:[%s166 + $0x54] sm:$0xf] %v676
        %709 = vst [vmem:[%s166 + $0x58] sm:$0xf] %v677
        %710 = vst [vmem:[%s166 + $0x5c] sm:$0xf] %v678
        %711 = vst [vmem:[%s166 + $0x60] sm:$0xf] %v679
        %712 = vst [vmem:[%s166 + $0x64] sm:$0xf] %v680
        %713 = vst [vmem:[%s166 + $0x68] sm:$0xf] %v681
        %714 = vst [vmem:[%s166 + $0x6c] sm:$0xf] %v682
        %715 = vst [vmem:[%s166 + $0x70] sm:$0xf] %v683
        %716 = vst [vmem:[%s166 + $0x74] sm:$0xf] %v684
        %717 = vst [vmem:[%s166 + $0x78] sm:$0xf] %v685
        %718 = vst [vmem:[%s166 + $0x7c] sm:$0xf] %v686
        %s719 = sand.u32 %s90, 1
        %s720 = scalar_lea.sflag [#allocation3], %s719
        %s721 = sand.u32 %s90, 1
        %s722 = smul.addr %s721, 128
        %s723 = scalar_lea.vmem [#allocation2], %s722
        // Predicated region
        $region29: #{tpu_custom_call.1} parent=27 // pred_check
          %p724 = pneg %p100
        $region30: #{tpu_custom_call.1} parent=27 // pred_check_branch
          %726 = sbr.rel (%p724) target = $region32
        $region31: #{tpu_custom_call.1} parent=27 // pred_region
          %s727 = smul.u32 32, %s21
          %729 = vsyncadd %s720, 0
          %s730 = sadd.s32 %s20, %s727
          %s731 = smul.addr %s730, 4
          %s732 = scalar_lea.hbm %s2, %s731
          %s733 = sshll.u32 %s723, 4
          %s734 = int_to_ptr.vmem [resolvable:$true] %s733
          %s735 = sshll.u32 %s732, 4
          %s736 = int_to_ptr.hbm [resolvable:$true] %s735
          %741 = dma.vmem_to_hbm [thread:$0]  %s734, 2048, %s736, %s720, 64, 64, 4
        $region32: #{tpu_custom_call.1} parent=27 // pred_fallthru
          _
      $region28: #{tpu_custom_call.1} parent=5 // pred_fallthru
        _
      %p742 = scmp.le.s32.totalorder 2, %s11
      // Predicated region
      $region33: #{tpu_custom_call.1} parent=5 // pred_check
        %p743 = pneg %p742
      $region34: #{tpu_custom_call.1} parent=5 // pred_check_branch
        %745 = sbr.rel (%p743) target = $region36
      $region35: #{tpu_custom_call.1} parent=5 // pred_region
        %s746 = ssub.s32 %s11, 2
        // Predicated region
        $region37: #{tpu_custom_call.1} parent=35 // pred_check
          %p747 = pneg %p106
        $region38: #{tpu_custom_call.1} parent=35 // pred_check_branch
          %749 = sbr.rel (%p747) target = $region40
        $region39: #{tpu_custom_call.1} parent=35 // pred_region
          %s750 = sand.u32 %s91, 1
          %s751 = scalar_lea.sflag [#allocation3], %s750
          %s752 = sand.u32 %s91, 1
          %s753 = smul.addr %s752, 128
          %s754 = scalar_lea.vmem [#allocation2], %s753
          %756 = dma.done %s751, 2048
        $region40: #{tpu_custom_call.1} parent=35 // pred_fallthru
          _
      $region36: #{tpu_custom_call.1} parent=5 // pred_fallthru
        _
    $region6: #{tpu_custom_call.1} parent=1 // loop_footer
      %s15 = sadd.s32 1, %s11
    $region7: #{tpu_custom_call.1} parent=1 // loop_footer_branch
      %10 = sbr.rel target = $region3
    $region8: #{tpu_custom_call.1} parent=1 // loop_exit
      _
    %757 = vsyncpa [#allocation3], 1
    %s758 = scalar_lea.sflag [#allocation3], 1
    %759 = vsyncpa %s758, 1

</llo_original>
